<compile_context>
chip_gen: v6e
topology: v6e:2x2x1
jax: 0.10.0
libtpu: 0.0.40
codegen_flags: <defaults>
</compile_context>

<pallas_src>
import math

import jax
import jax.numpy as jnp
from jax.experimental import pallas as pl
from jax.experimental.pallas import tpu as pltpu


# ------------------------------- kernel -------------------------------

def dqn_kernel(obs_ref,
               w1_ref, b1_ref, w2_ref, b2_ref,
               w3_ref, b3_ref, w4_ref, b4_ref, out_ref):
    # Input affine (BN) + embedding already folded into w1/b1 on the host.
    x = obs_ref[...].astype(jnp.bfloat16)

    # layer1: (folded) slimmable linear + BN + ReLU
    h = jnp.dot(x, w1_ref[...], preferred_element_type=jnp.float32) + b1_ref[...]
    h = jnp.maximum(h, 0.0)

    # layer2: linear + BN(folded) + ReLU
    h = jnp.dot(h.astype(jnp.bfloat16), w2_ref[...],
                preferred_element_type=jnp.float32) + b2_ref[...]
    h = jnp.maximum(h, 0.0)

    # layer3: linear + BN(folded) + ReLU
    h = jnp.dot(h.astype(jnp.bfloat16), w3_ref[...],
                preferred_element_type=jnp.float32) + b3_ref[...]
    h = jnp.maximum(h, 0.0)

    # last layer: plain linear (lane-padded output; padded cols are exact zeros)
    out_ref[...] = (
        jnp.dot(h.astype(jnp.bfloat16), w4_ref[...],
                preferred_element_type=jnp.float32) + b4_ref[...]
    )


# ------------------------------- wrapper -------------------------------

def dqn_forward(obs, w1, b1, w2, b2, w3, b3, w4, b4,
                *, num_actions, block_b=256):
    """obs: (B, n_state) f32. Weights are lane-padded bf16 (in,out); biases f32 (1,out)."""
    B, n_in = obs.shape
    n_out_p = w4.shape[1]          # padded (multiple of 128)

    # Pad the batch (M) dim to the f32 sublane quantum / batch tile.
    if B >= block_b:
        TB = block_b
    else:
        TB = max(8, -(-B // 8) * 8)
    Bp = -(-B // TB) * TB
    if Bp != B:
        obs = jnp.pad(obs, ((0, Bp - B), (0, 0)))

    grid = (Bp // TB,)

    def resident(arr):
        # Full-array block, resident across the batch grid, pinned in VMEM.
        return pl.BlockSpec(arr.shape, lambda i: (0, 0),
                            memory_space=pltpu.MemorySpace.VMEM)

    in_specs = [
        pl.BlockSpec((TB, n_in), lambda i: (i, 0),
                     memory_space=pltpu.MemorySpace.VMEM),
        resident(w1), resident(b1),
        resident(w2), resident(b2),
        resident(w3), resident(b3),
        resident(w4), resident(b4),
    ]
    out_specs = pl.BlockSpec((TB, n_out_p), lambda i: (i, 0),
                             memory_space=pltpu.MemorySpace.VMEM)

    out_padded = pl.pallas_call(
        dqn_kernel,
        out_shape=jax.ShapeDtypeStruct((Bp, n_out_p), jnp.float32),
        grid_spec=pltpu.PrefetchScalarGridSpec(
            num_scalar_prefetch=0,
            grid=grid,
            in_specs=in_specs,
            out_specs=out_specs,
        ),
        compiler_params=pltpu.CompilerParams(
            dimension_semantics=("parallel",)),
    )(obs, w1, b1, w2, b2, w3, b3, w4, b4)

    return out_padded[:B, :num_actions]


# ------------------- parameter construction (plain JAX glue) -------------------

def kaiming_uniform(key, out_f, in_f):
    # nn.init.kaiming_uniform_(mode='fan_in', default leaky_relu a=0) -> bound = sqrt(6/fan_in)
    bound = math.sqrt(6.0 / in_f)
    return jax.random.uniform(key, (out_f, in_f), jnp.float32, -bound, bound)


def linear_bias(key, out_f, in_f):
    bound = 1.0 / math.sqrt(in_f)
    return jax.random.uniform(key, (out_f,), jnp.float32, -bound, bound)


def fold_bn_into_linear(w, b, gamma, beta, mean, var, eps=1e-5):
    """y = BN(x @ w.T + b)  ->  x @ w_f + b_f  with w_f: (in, out), b_f: (1, out)."""
    s = gamma / jnp.sqrt(var + eps)
    w_f = w.T * s[None, :]
    b_f = b * s + (beta - mean * s)
    return w_f.astype(jnp.float32), b_f[None, :].astype(jnp.float32)


def bn_affine(gamma, beta, mean, var, eps=1e-5):
    s = gamma / jnp.sqrt(var + eps)
    t = beta - mean * s
    return s[None, :].astype(jnp.float32), t[None, :].astype(jnp.float32)


def pad_cols(a, to):
    return jnp.pad(a, ((0, 0), (0, to - a.shape[1])))


def pad_rows(a, to):
    return jnp.pad(a, ((0, to - a.shape[0]), (0, 0)))


if __name__ == "__main__":
    key = jax.random.PRNGKey(0)
    keys = jax.random.split(key, 12)

    # DQN config (small, consistent with the module): num_state list, pick stage=1.
    num_state = [8, 16]           # slimmable feature widths
    stage = 1
    n_state = num_state[stage]    # obs feature dim for this stage
    max_state = max(num_state)
    num_feat = 64
    num_actions = 100
    B = 4

    # --- parameters (deterministic, eval-mode BN stats) ---
    # nn.Embedding(2, max_state): default N(0, 1)
    emb_weight = jax.random.normal(keys[0], (2, max_state), jnp.float32)
    emb_row = emb_weight[stage, :n_state][None, :]            # (1, n_state)

    # input SlimmableBatchNorm1d (eval-mode: mean=0, var=1, gamma=1, beta=0)
    in_scale, in_bias = bn_affine(
        jnp.ones((n_state,)), jnp.zeros((n_state,)),
        jnp.zeros((n_state,)), jnp.ones((n_state,)))

    # layer1: SlimmableBlock -> Linear weight (num_feat, max_state), sliced to n_state cols
    w1_full = kaiming_uniform(keys[1], num_feat, max_state)
    b1_full = linear_bias(keys[2], num_feat, max_state)
    w1_f32, b1_f32 = fold_bn_into_linear(
        w1_full[:, :n_state], b1_full,
        jnp.ones((num_feat,)), jnp.zeros((num_feat,)),
        jnp.zeros((num_feat,)), jnp.ones((num_feat,)))

    # layer2: Linear(num_feat -> 2*num_feat) + BN
    w2_raw = kaiming_uniform(keys[3], 2 * num_feat, num_feat)
    b2_raw = linear_bias(keys[4], 2 * num_feat, num_feat)
    w2_f32, b2_f32 = fold_bn_into_linear(
        w2_raw, b2_raw,
        jnp.ones((2 * num_feat,)), jnp.zeros((2 * num_feat,)),
        jnp.zeros((2 * num_feat,)), jnp.ones((2 * num_feat,)))

    # layer3: Linear(2*num_feat -> 4*num_feat) + BN
    w3_raw = kaiming_uniform(keys[5], 4 * num_feat, 2 * num_feat)
    b3_raw = linear_bias(keys[6], 4 * num_feat, 2 * num_feat)
    w3_f32, b3_f32 = fold_bn_into_linear(
        w3_raw, b3_raw,
        jnp.ones((4 * num_feat,)), jnp.zeros((4 * num_feat,)),
        jnp.zeros((4 * num_feat,)), jnp.ones((4 * num_feat,)))

    # last layer: Linear(4*num_feat -> num_actions), no BN/activation
    w4_raw = kaiming_uniform(keys[7], num_actions, 4 * num_feat)
    b4_raw = linear_bias(keys[8], num_actions, 4 * num_feat)
    w4_f32 = w4_raw.T.astype(jnp.float32)
    b4_f32 = b4_raw[None, :].astype(jnp.float32)

    # --- fold input BN affine + stage embedding into layer1 (host-side algebra) ---
    # ReLU((obs*s + t) @ W1 + b1) == ReLU(obs @ (s[:,None]*W1) + (t @ W1 + b1)),  t = in_bias + emb_row
    t_row = in_bias + emb_row
    w1_fold = in_scale.T * w1_f32                       # (n_state, num_feat)
    b1_fold = t_row @ w1_f32 + b1_f32                   # (1, num_feat)

    # --- lane padding: hidden1 64 -> 128, output 100 -> 128 (zeros; sliced off later) ---
    H1P = 128
    NOUT_P = 128
    w1_p = pad_cols(w1_fold, H1P)                       # (16, 128)
    b1_p = pad_cols(b1_fold, H1P)                       # (1, 128)
    w2_p = pad_rows(w2_f32, H1P)                        # (128, 128)  padded rows are zero
    b2_p = b2_f32                                       # (1, 128)
    w3_p = w3_f32                                       # (128, 256)
    b3_p = b3_f32                                       # (1, 256)
    w4_p = pad_cols(w4_f32, NOUT_P)                     # (256, 128)  padded cols are zero
    b4_p = pad_cols(b4_f32, NOUT_P)                     # (1, 128)

    # bf16 weights for the MXU; biases stay f32 (added post-accumulation).
    w1_k = w1_p.astype(jnp.bfloat16)
    w2_k = w2_p.astype(jnp.bfloat16)
    w3_k = w3_p.astype(jnp.bfloat16)
    w4_k = w4_p.astype(jnp.bfloat16)

    # --- input ---
    obs = jax.random.normal(keys[9], (B, n_state), jnp.float32)

    # --- run kernel ---
    out = dqn_forward(obs, w1_k, b1_p, w2_k, b2_p, w3_k, b3_p, w4_k, b4_p,
                      num_actions=num_actions)
    out = jax.block_until_ready(out)
    assert out.shape == (B, num_actions), out.shape

    # --- references ---
    # (a) bf16-mirror reference (same numerics as the kernel)
    def mm(x, w):
        return jnp.dot(x.astype(jnp.bfloat16), w, preferred_element_type=jnp.float32)

    h = jnp.maximum(mm(obs, w1_k) + b1_p, 0.0)
    h = jnp.maximum(mm(h, w2_k) + b2_p, 0.0)
    h = jnp.maximum(mm(h, w3_k) + b3_p, 0.0)
    ref_bf16 = (mm(h, w4_k) + b4_p)[:, :num_actions]
    assert jnp.allclose(out, ref_bf16, atol=1e-2, rtol=1e-2)

    # (b) full-f32 reference of the original (unfolded, unpadded) math — loose tol for bf16 weights
    x_ref = obs * in_scale + in_bias + emb_row
    h = jnp.maximum(x_ref @ w1_f32 + b1_f32, 0.0)
    h = jnp.maximum(h @ w2_f32 + b2_f32, 0.0)
    h = jnp.maximum(h @ w3_f32 + b3_f32, 0.0)
    ref_f32 = h @ w4_f32 + b4_f32
    assert jnp.allclose(out, ref_f32, atol=1e-1, rtol=1e-1)

    print("KERNEL_OK")
</pallas_src>

<mosaic_0001>
module attributes {stable_mosaic.version = 11 : i64} {
  func.func @dqn_kernel(%arg0: i32, %arg1: memref<8x16xf32, #tpu.memory_space<vmem>>, %arg2: memref<16x128xbf16, #tpu.memory_space<vmem>>, %arg3: memref<1x128xf32, #tpu.memory_space<vmem>>, %arg4: memref<128x128xbf16, #tpu.memory_space<vmem>>, %arg5: memref<1x128xf32, #tpu.memory_space<vmem>>, %arg6: memref<128x256xbf16, #tpu.memory_space<vmem>>, %arg7: memref<1x256xf32, #tpu.memory_space<vmem>>, %arg8: memref<256x128xbf16, #tpu.memory_space<vmem>>, %arg9: memref<1x128xf32, #tpu.memory_space<vmem>>, %arg10: memref<8x128xf32, #tpu.memory_space<vmem>>) attributes {dimension_semantics = [#tpu.dimension_semantics<parallel>], iteration_bounds = array<i64: 1>, scalar_prefetch = 0 : i64, scratch_operands = 0 : i64, tpu.core_type = #tpu.core_type<tc>, window_params = [{transform_indices = @transform_0, window_bounds = array<i64: 8, 16>}, {pipeline_mode = #tpu.pipeline_mode<synchronous>, transform_indices = @transform_1, window_bounds = array<i64: 16, 128>}, {pipeline_mode = #tpu.pipeline_mode<synchronous>, transform_indices = @transform_2, window_bounds = array<i64: 1, 128>}, {pipeline_mode = #tpu.pipeline_mode<synchronous>, transform_indices = @transform_3, window_bounds = array<i64: 128, 128>}, {pipeline_mode = #tpu.pipeline_mode<synchronous>, transform_indices = @transform_4, window_bounds = array<i64: 1, 128>}, {pipeline_mode = #tpu.pipeline_mode<synchronous>, transform_indices = @transform_5, window_bounds = array<i64: 128, 256>}, {pipeline_mode = #tpu.pipeline_mode<synchronous>, transform_indices = @transform_6, window_bounds = array<i64: 1, 256>}, {pipeline_mode = #tpu.pipeline_mode<synchronous>, transform_indices = @transform_7, window_bounds = array<i64: 256, 128>}, {pipeline_mode = #tpu.pipeline_mode<synchronous>, transform_indices = @transform_8, window_bounds = array<i64: 1, 128>}, {transform_indices = @transform_9, window_bounds = array<i64: 8, 128>}]} {
    %c0 = arith.constant 0 : index
    %c0_0 = arith.constant 0 : index
    %0 = vector.load %arg1[%c0, %c0_0] : memref<8x16xf32, #tpu.memory_space<vmem>>, vector<8x16xf32>
    %1 = arith.truncf %0 : vector<8x16xf32> to vector<8x16xbf16>
    %c0_1 = arith.constant 0 : index
    %c0_2 = arith.constant 0 : index
    %2 = vector.load %arg2[%c0_1, %c0_2] : memref<16x128xbf16, #tpu.memory_space<vmem>>, vector<16x128xbf16>
    %cst = arith.constant dense<0.000000e+00> : vector<8x128xf32>
    %3 = tpu.matmul %1, %2, %cst {dimension_numbers = #tpu.dot_dimension_numbers<[1], [0], [0], [1], [0, 0, 1, 1], [], []>} : vector<8x16xbf16>, vector<16x128xbf16>, vector<8x128xf32> -> vector<8x128xf32>
    %c0_3 = arith.constant 0 : index
    %c0_4 = arith.constant 0 : index
    %4 = vector.load %arg3[%c0_3, %c0_4] : memref<1x128xf32, #tpu.memory_space<vmem>>, vector<1x128xf32>
    %5 = vector.broadcast %4 : vector<1x128xf32> to vector<8x128xf32>
    %6 = arith.addf %3, %5 : vector<8x128xf32>
    %cst_5 = arith.constant 0.000000e+00 : f32
    %7 = vector.broadcast %cst_5 : f32 to vector<8x128xf32>
    %8 = arith.maximumf %6, %7 : vector<8x128xf32>
    %9 = arith.truncf %8 : vector<8x128xf32> to vector<8x128xbf16>
    %c0_6 = arith.constant 0 : index
    %c0_7 = arith.constant 0 : index
    %10 = vector.load %arg4[%c0_6, %c0_7] : memref<128x128xbf16, #tpu.memory_space<vmem>>, vector<128x128xbf16>
    %cst_8 = arith.constant dense<0.000000e+00> : vector<8x128xf32>
    %11 = tpu.matmul %9, %10, %cst_8 {dimension_numbers = #tpu.dot_dimension_numbers<[1], [0], [0], [1], [0, 0, 1, 1], [], []>} : vector<8x128xbf16>, vector<128x128xbf16>, vector<8x128xf32> -> vector<8x128xf32>
    %c0_9 = arith.constant 0 : index
    %c0_10 = arith.constant 0 : index
    %12 = vector.load %arg5[%c0_9, %c0_10] : memref<1x128xf32, #tpu.memory_space<vmem>>, vector<1x128xf32>
    %13 = vector.broadcast %12 : vector<1x128xf32> to vector<8x128xf32>
    %14 = arith.addf %11, %13 : vector<8x128xf32>
    %cst_11 = arith.constant 0.000000e+00 : f32
    %15 = vector.broadcast %cst_11 : f32 to vector<8x128xf32>
    %16 = arith.maximumf %14, %15 : vector<8x128xf32>
    %17 = arith.truncf %16 : vector<8x128xf32> to vector<8x128xbf16>
    %c0_12 = arith.constant 0 : index
    %c0_13 = arith.constant 0 : index
    %18 = vector.load %arg6[%c0_12, %c0_13] : memref<128x256xbf16, #tpu.memory_space<vmem>>, vector<128x256xbf16>
    %cst_14 = arith.constant dense<0.000000e+00> : vector<8x256xf32>
    %19 = tpu.matmul %17, %18, %cst_14 {dimension_numbers = #tpu.dot_dimension_numbers<[1], [0], [0], [1], [0, 0, 1, 1], [], []>} : vector<8x128xbf16>, vector<128x256xbf16>, vector<8x256xf32> -> vector<8x256xf32>
    %c0_15 = arith.constant 0 : index
    %c0_16 = arith.constant 0 : index
    %20 = vector.load %arg7[%c0_15, %c0_16] : memref<1x256xf32, #tpu.memory_space<vmem>>, vector<1x256xf32>
    %21 = vector.broadcast %20 : vector<1x256xf32> to vector<8x256xf32>
    %22 = arith.addf %19, %21 : vector<8x256xf32>
    %cst_17 = arith.constant 0.000000e+00 : f32
    %23 = vector.broadcast %cst_17 : f32 to vector<8x256xf32>
    %24 = arith.maximumf %22, %23 : vector<8x256xf32>
    %25 = arith.truncf %24 : vector<8x256xf32> to vector<8x256xbf16>
    %c0_18 = arith.constant 0 : index
    %c0_19 = arith.constant 0 : index
    %26 = vector.load %arg8[%c0_18, %c0_19] : memref<256x128xbf16, #tpu.memory_space<vmem>>, vector<256x128xbf16>
    %cst_20 = arith.constant dense<0.000000e+00> : vector<8x128xf32>
    %27 = tpu.matmul %25, %26, %cst_20 {dimension_numbers = #tpu.dot_dimension_numbers<[1], [0], [0], [1], [0, 0, 1, 1], [], []>} : vector<8x256xbf16>, vector<256x128xbf16>, vector<8x128xf32> -> vector<8x128xf32>
    %c0_21 = arith.constant 0 : index
    %c0_22 = arith.constant 0 : index
    %28 = vector.load %arg9[%c0_21, %c0_22] : memref<1x128xf32, #tpu.memory_space<vmem>>, vector<1x128xf32>
    %29 = vector.broadcast %28 : vector<1x128xf32> to vector<8x128xf32>
    %30 = arith.addf %27, %29 : vector<8x128xf32>
    %c0_23 = arith.constant 0 : index
    %c0_24 = arith.constant 0 : index
    %31 = vector.load %arg10[%c0_23, %c0_24] : memref<8x128xf32, #tpu.memory_space<vmem>>, vector<8x128xf32>
    tpu.vector_store %arg10[%c0_23, %c0_24], %30 {strides = array<i32>} : memref<8x128xf32, #tpu.memory_space<vmem>>, vector<8x128xf32>,
    return
  }
  func.func @transform_0(%arg0: i32) -> (i32, i32) {
    %c0_i32 = arith.constant 0 : i32
    %c0_i32_0 = arith.constant 0 : i32
    return %arg0, %c0_i32 : i32, i32
  }
  func.func @transform_1(%arg0: i32) -> (i32, i32) {
    %c0_i32 = arith.constant 0 : i32
    %c0_i32_0 = arith.constant 0 : i32
    %c0_i32_1 = arith.constant 0 : i32
    return %c0_i32, %c0_i32_0 : i32, i32
  }
  func.func @transform_2(%arg0: i32) -> (i32, i32) {
    %c0_i32 = arith.constant 0 : i32
    %c0_i32_0 = arith.constant 0 : i32
    %c0_i32_1 = arith.constant 0 : i32
    return %c0_i32, %c0_i32_0 : i32, i32
  }
  func.func @transform_3(%arg0: i32) -> (i32, i32) {
    %c0_i32 = arith.constant 0 : i32
    %c0_i32_0 = arith.constant 0 : i32
    %c0_i32_1 = arith.constant 0 : i32
    return %c0_i32, %c0_i32_0 : i32, i32
  }
  func.func @transform_4(%arg0: i32) -> (i32, i32) {
    %c0_i32 = arith.constant 0 : i32
    %c0_i32_0 = arith.constant 0 : i32
    %c0_i32_1 = arith.constant 0 : i32
    return %c0_i32, %c0_i32_0 : i32, i32
  }
  func.func @transform_5(%arg0: i32) -> (i32, i32) {
    %c0_i32 = arith.constant 0 : i32
    %c0_i32_0 = arith.constant 0 : i32
    %c0_i32_1 = arith.constant 0 : i32
    return %c0_i32, %c0_i32_0 : i32, i32
  }
  func.func @transform_6(%arg0: i32) -> (i32, i32) {
    %c0_i32 = arith.constant 0 : i32
    %c0_i32_0 = arith.constant 0 : i32
    %c0_i32_1 = arith.constant 0 : i32
    return %c0_i32, %c0_i32_0 : i32, i32
  }
  func.func @transform_7(%arg0: i32) -> (i32, i32) {
    %c0_i32 = arith.constant 0 : i32
    %c0_i32_0 = arith.constant 0 : i32
    %c0_i32_1 = arith.constant 0 : i32
    return %c0_i32, %c0_i32_0 : i32, i32
  }
  func.func @transform_8(%arg0: i32) -> (i32, i32) {
    %c0_i32 = arith.constant 0 : i32
    %c0_i32_0 = arith.constant 0 : i32
    %c0_i32_1 = arith.constant 0 : i32
    return %c0_i32, %c0_i32_0 : i32, i32
  }
  func.func @transform_9(%arg0: i32) -> (i32, i32) {
    %c0_i32 = arith.constant 0 : i32
    %c0_i32_0 = arith.constant 0 : i32
    return %arg0, %c0_i32 : i32, i32
  }
}

</mosaic_0001>

<llo_original>
// kernel: tpu_custom_call.1
$region0: #{tpu_custom_call.1}
  #allocation0 [shape = 'u32[]', space=smem, size = 0x4, offset = 0x4, fixed_abs, tag = 'smem constant byte address 0x4 - core index']
  #allocation1 [shape = 'u32[144,128]{1,0:T(1,128)}', space=vmem, size = 0x12000, scoped, tag = 'internal scratch']
  %s0 = inlined_call_operand.hbm [shape: f32[8,16], index: 0, kind: input, shape index: {}]
  %s1 = inlined_call_operand.hbm [shape: bf16[16,128], index: 1, kind: input, shape index: {}]
  %s2 = inlined_call_operand.vmem [shape: f32[1,128], index: 2, kind: input, shape index: {}]
  %s3 = inlined_call_operand.hbm [shape: bf16[128,128], index: 3, kind: input, shape index: {}]
  %s4 = inlined_call_operand.vmem [shape: f32[1,128], index: 4, kind: input, shape index: {}]
  %s5 = inlined_call_operand.hbm [shape: bf16[128,256], index: 5, kind: input, shape index: {}]
  %s6 = inlined_call_operand.vmem [shape: f32[1,256], index: 6, kind: input, shape index: {}]
  %s7 = inlined_call_operand.hbm [shape: bf16[256,128], index: 7, kind: input, shape index: {}]
  %s8 = inlined_call_operand.vmem [shape: f32[1,128], index: 8, kind: input, shape index: {}]
  %s9 = inlined_call_operand.hbm [shape: f32[8,128], index: 9, kind: output, shape index: {}]
  %s10 = sld [smem:[#allocation0]]
  $region66: #{tpu_custom_call.1} parent=0
    _
  %s12 = ssub.s32 1, %s10
  %s13 = scalar_select 0, %s12, %s10
  $region1: #{tpu_custom_call.1} parent=0
    #allocation2 [shape = 'u8[4096]{0}', space=vmem, size = 0x1000, scoped, tag = 'input window, operand 0, single buffered']
    #allocation3 [shape = 's32[1]{0}', space=sflag, size = 0x4, scoped, tag = 'scoped memory for tpu_custom_call.1']
    #allocation4 [shape = 's32[1]{0}', space=sflag, size = 0x4, scoped, tag = 'scoped memory for tpu_custom_call.1']
    #allocation5 [shape = 'u8[4096]{0}', space=vmem, size = 0x1000, scoped, tag = 'input window, operand 1, single buffered']
    #allocation6 [shape = 's32[1]{0}', space=sflag, size = 0x4, scoped, tag = 'scoped memory for tpu_custom_call.1']
    #allocation7 [shape = 'u8[32768]{0}', space=vmem, size = 0x8000, scoped, tag = 'input window, operand 3, single buffered']
    #allocation8 [shape = 'u8[65536]{0}', space=vmem, size = 0x10000, scoped, tag = 'input window, operand 5, single buffered']
    #allocation9 [shape = 's32[1]{0}', space=sflag, size = 0x4, scoped, tag = 'scoped memory for tpu_custom_call.1']
    #allocation10 [shape = 'u8[65536]{0}', space=vmem, size = 0x10000, scoped, tag = 'input window, operand 7, single buffered']
    #allocation11 [shape = 'u8[4096]{0}', space=vmem, size = 0x1000, scoped, tag = 'output window, operand 0, single buffered']
    %14 = vsyncpa [#allocation3], 0
    %15 = vsyncpa [#allocation6], 0
    %16 = vsyncpa [#allocation9], 0
    %17 = vsyncpa [#allocation4], 0
    // Predicated region
    $region2: #{tpu_custom_call.1} parent=1 // pred_check
      _
    $region3: #{tpu_custom_call.1} parent=1 // pred_check_branch
      %19 = sbr.rel (0) target = $region5
    $region4: #{tpu_custom_call.1} parent=1 // pred_region
      %s21 = ssub.s32 128, 128
      %22 = vsyncadd [#allocation3], %s21
      %s24 = sshll.u32 [#allocation2], 4
      %s25 = int_to_ptr.vmem [resolvable:$true] %s24
      %27 = dma.hbm_to_vmem [thread:$0]  %s0, 128, %s25, [#allocation3]
    $region5: #{tpu_custom_call.1} parent=1 // pred_fallthru
      _
    // Predicated region
    $region6: #{tpu_custom_call.1} parent=1 // pred_check
      _
    $region7: #{tpu_custom_call.1} parent=1 // pred_check_branch
      %29 = sbr.rel (0) target = $region9
    $region8: #{tpu_custom_call.1} parent=1 // pred_region
      %s31 = ssub.s32 128, 128
      %32 = vsyncadd [#allocation6], %s31
      %s33 = sshll.u32 [#allocation5], 4
      %s34 = int_to_ptr.vmem [resolvable:$true] %s33
      %39 = dma.hbm_to_vmem [thread:$0]  %s1, 128, %s34, [#allocation6], 64, 64, 4
    $region9: #{tpu_custom_call.1} parent=1 // pred_fallthru
      _
    // Predicated region
    $region10: #{tpu_custom_call.1} parent=1 // pred_check
      _
    $region11: #{tpu_custom_call.1} parent=1 // pred_check_branch
      %41 = sbr.rel (0) target = $region13
    $region12: #{tpu_custom_call.1} parent=1 // pred_region
      _
    $region13: #{tpu_custom_call.1} parent=1 // pred_fallthru
      _
    // Predicated region
    $region14: #{tpu_custom_call.1} parent=1 // pred_check
      _
    $region15: #{tpu_custom_call.1} parent=1 // pred_check_branch
      %43 = sbr.rel (0) target = $region17
    $region16: #{tpu_custom_call.1} parent=1 // pred_region
      %s45 = ssub.s32 1024, 1024
      %46 = vsyncadd [#allocation6], %s45
      %s47 = sshll.u32 [#allocation7], 4
      %s48 = int_to_ptr.vmem [resolvable:$true] %s47
      %53 = dma.hbm_to_vmem [thread:$0]  %s3, 1024, %s48, [#allocation6], 64, 64, 4
    $region17: #{tpu_custom_call.1} parent=1 // pred_fallthru
      _
    // Predicated region
    $region18: #{tpu_custom_call.1} parent=1 // pred_check
      _
    $region19: #{tpu_custom_call.1} parent=1 // pred_check_branch
      %55 = sbr.rel (0) target = $region21
    $region20: #{tpu_custom_call.1} parent=1 // pred_region
      _
    $region21: #{tpu_custom_call.1} parent=1 // pred_fallthru
      _
    // Predicated region
    $region22: #{tpu_custom_call.1} parent=1 // pred_check
      _
    $region23: #{tpu_custom_call.1} parent=1 // pred_check_branch
      %57 = sbr.rel (0) target = $region25
    $region24: #{tpu_custom_call.1} parent=1 // pred_region
      %s59 = ssub.s32 2048, 2048
      %60 = vsyncadd [#allocation9], %s59
      %s61 = sshll.u32 [#allocation8], 4
      %s62 = int_to_ptr.vmem [resolvable:$true] %s61
      %67 = dma.hbm_to_vmem [thread:$0]  %s5, 2048, %s62, [#allocation9], 128, 128, 8
    $region25: #{tpu_custom_call.1} parent=1 // pred_fallthru
      _
    // Predicated region
    $region26: #{tpu_custom_call.1} parent=1 // pred_check
      _
    $region27: #{tpu_custom_call.1} parent=1 // pred_check_branch
      %69 = sbr.rel (0) target = $region29
    $region28: #{tpu_custom_call.1} parent=1 // pred_region
      _
    $region29: #{tpu_custom_call.1} parent=1 // pred_fallthru
      _
    // Predicated region
    $region30: #{tpu_custom_call.1} parent=1 // pred_check
      _
    $region31: #{tpu_custom_call.1} parent=1 // pred_check_branch
      %71 = sbr.rel (0) target = $region33
    $region32: #{tpu_custom_call.1} parent=1 // pred_region
      %s73 = ssub.s32 2048, 2048
      %74 = vsyncadd [#allocation9], %s73
      %s75 = sshll.u32 [#allocation10], 4
      %s76 = int_to_ptr.vmem [resolvable:$true] %s75
      %81 = dma.hbm_to_vmem [thread:$0]  %s7, 2048, %s76, [#allocation9], 64, 64, 4
    $region33: #{tpu_custom_call.1} parent=1 // pred_fallthru
      _
    // Predicated region
    $region34: #{tpu_custom_call.1} parent=1 // pred_check
      _
    $region35: #{tpu_custom_call.1} parent=1 // pred_check_branch
      %83 = sbr.rel (0) target = $region37
    $region36: #{tpu_custom_call.1} parent=1 // pred_region
      _
    $region37: #{tpu_custom_call.1} parent=1 // pred_fallthru
      _
    // Predicated region
    $region38: #{tpu_custom_call.1} parent=1 // pred_check
      _
    $region39: #{tpu_custom_call.1} parent=1 // pred_check_branch
      %85 = sbr.rel (0) target = $region41
    $region40: #{tpu_custom_call.1} parent=1 // pred_region
      %86 = dma.done [#allocation3], 128
    $region41: #{tpu_custom_call.1} parent=1 // pred_fallthru
      _
    // Predicated region
    $region42: #{tpu_custom_call.1} parent=1 // pred_check
      _
    $region43: #{tpu_custom_call.1} parent=1 // pred_check_branch
      %88 = sbr.rel (0) target = $region45
    $region44: #{tpu_custom_call.1} parent=1 // pred_region
      %89 = dma.done [#allocation6], 128
    $region45: #{tpu_custom_call.1} parent=1 // pred_fallthru
      _
    // Predicated region
    $region46: #{tpu_custom_call.1} parent=1 // pred_check
      _
    $region47: #{tpu_custom_call.1} parent=1 // pred_check_branch
      %91 = sbr.rel (0) target = $region49
    $region48: #{tpu_custom_call.1} parent=1 // pred_region
      %92 = dma.done [#allocation6], 1024
    $region49: #{tpu_custom_call.1} parent=1 // pred_fallthru
      _
    // Predicated region
    $region50: #{tpu_custom_call.1} parent=1 // pred_check
      _
    $region51: #{tpu_custom_call.1} parent=1 // pred_check_branch
      %94 = sbr.rel (0) target = $region53
    $region52: #{tpu_custom_call.1} parent=1 // pred_region
      %95 = dma.done [#allocation9], 2048
    $region53: #{tpu_custom_call.1} parent=1 // pred_fallthru
      _
    // Predicated region
    $region54: #{tpu_custom_call.1} parent=1 // pred_check
      _
    $region55: #{tpu_custom_call.1} parent=1 // pred_check_branch
      %97 = sbr.rel (0) target = $region57
    $region56: #{tpu_custom_call.1} parent=1 // pred_region
      %98 = dma.done [#allocation9], 2048
    $region57: #{tpu_custom_call.1} parent=1 // pred_fallthru
      _
    %v100 = vld [vmem:[#allocation2] sm:$0xff]
    %v101 = vpack.c.bf16 %v100, %v100
    %v102 = vld [vmem:[#allocation5] sm:$0xf]
    %v103 = vld [vmem:[#allocation5 + $0x4] sm:$0xf]
    %v104 = vld [vmem:[%s2] sm:$0x1]
    %v106 = vlaneseq
    %v107 = vshrl.u32 %v106, 7
    %v108 = vsub.s32 0, %v107
    %v109 = vrot.slane %v104, %v108
    %v113 = vunpack.c.l.b16 %v102
    %v114 = vunpack.c.l.b16 %v103
    %v115 = vpack.c.b16 %v114, %v113
    %vm117 = vcmask 130048
    %v119 = vsel %vm117, %v101, 0
    %121 = vmatprep.subr.bf16.mxu0 0
    %122 = vmatpush1.bf16.msra.mxu0 0
    %123 = vmatprep.subr.bf16.mxu0 0
    %124 = vmatpush1.bf16.msra.mxu0 0
    %125 = vmatprep.subr.bf16.mxu0 0
    %126 = vmatpush1.bf16.msra.mxu0 0
    %127 = vmatprep.subr.bf16.mxu0 0
    %128 = vmatpush1.bf16.msra.mxu0 0
    %129 = vmatprep.subr.bf16.mxu0 0
    %130 = vmatpush1.bf16.msra.mxu0 0
    %131 = vmatprep.subr.bf16.mxu0 0
    %132 = vmatpush1.bf16.msra.mxu0 0
    %133 = vmatprep.subr.bf16.mxu0 0
    %134 = vmatpush1.bf16.msra.mxu0 0
    %135 = vmatprep.subr.bf16.mxu0 0
    %136 = vmatpush1.bf16.msra.mxu0 %v115
    %137 = vmatprep.subr.bf16.mxu0 0
    %138 = vmatpush2.bf16.msra.mxu0 0
    %139 = vmatprep.subr.bf16.mxu0 0
    %140 = vmatpush2.bf16.msra.mxu0 0
    %141 = vmatprep.subr.bf16.mxu0 0
    %142 = vmatpush2.bf16.msra.mxu0 0
    %143 = vmatprep.subr.bf16.mxu0 0
    %144 = vmatpush2.bf16.msra.mxu0 0
    %145 = vmatprep.subr.bf16.mxu0 0
    %146 = vmatpush2.bf16.msra.mxu0 0
    %147 = vmatprep.subr.bf16.mxu0 0
    %148 = vmatpush2.bf16.msra.mxu0 0
    %149 = vmatprep.subr.bf16.mxu0 0
    %150 = vmatpush2.bf16.msra.mxu0 0
    %151 = vmatprep.subr.bf16.mxu0 0
    %152 = vmatpush2.bf16.msra.mxu0 0
    %153 = vmatprep.mubr.bf16.mxu0 0
    %154 = vmatmul.mubr.bf16.gmra.mxu0 %v119
    %v155 = vpop.f32.mrf.mxu0
    %v156 = vadd.f32 %v109, %v155
    %v157 = vpop.f32.mrf.mxu0
    %v158 = vpop.f32.mrf.mxu0
    %v159 = vpop.f32.mrf.mxu0
    %160 = vdwg.mxu0
    %v161 = vmax.f32 %v156, 0.0
    %v162 = vpack.c.bf16 %v161, %v161
    %v163 = vld [vmem:[#allocation7] sm:$0xf]
    %v164 = vld [vmem:[#allocation7 + $0x4] sm:$0xf]
    %v165 = vld [vmem:[#allocation7 + $0x8] sm:$0xf]
    %v166 = vld [vmem:[#allocation7 + $0xc] sm:$0xf]
    %v167 = vld [vmem:[#allocation7 + $0x10] sm:$0xf]
    %v168 = vld [vmem:[#allocation7 + $0x14] sm:$0xf]
    %v169 = vld [vmem:[#allocation7 + $0x18] sm:$0xf]
    %v170 = vld [vmem:[#allocation7 + $0x1c] sm:$0xf]
    %v171 = vld [vmem:[#allocation7 + $0x20] sm:$0xf]
    %v172 = vld [vmem:[#allocation7 + $0x24] sm:$0xf]
    %v173 = vld [vmem:[#allocation7 + $0x28] sm:$0xf]
    %v174 = vld [vmem:[#allocation7 + $0x2c] sm:$0xf]
    %v175 = vld [vmem:[#allocation7 + $0x30] sm:$0xf]
    %v176 = vld [vmem:[#allocation7 + $0x34] sm:$0xf]
    %v177 = vld [vmem:[#allocation7 + $0x38] sm:$0xf]
    %v178 = vld [vmem:[#allocation7 + $0x3c] sm:$0xf]
    %v179 = vld [vmem:[%s4] sm:$0x1]
    %v181 = vlaneseq
    %v182 = vshrl.u32 %v181, 7
    %v183 = vsub.s32 0, %v182
    %v184 = vrot.slane %v179, %v183
    %v202 = vunpack.c.l.b16 %v163
    %v203 = vunpack.c.l.b16 %v164
    %v204 = vunpack.c.l.b16 %v165
    %v205 = vunpack.c.l.b16 %v166
    %v206 = vunpack.c.l.b16 %v167
    %v207 = vunpack.c.l.b16 %v168
    %v208 = vunpack.c.l.b16 %v169
    %v209 = vunpack.c.l.b16 %v170
    %v210 = vunpack.c.l.b16 %v171
    %v211 = vunpack.c.l.b16 %v172
    %v212 = vunpack.c.l.b16 %v173
    %v213 = vunpack.c.l.b16 %v174
    %v214 = vunpack.c.l.b16 %v175
    %v215 = vunpack.c.l.b16 %v176
    %v216 = vunpack.c.l.b16 %v177
    %v217 = vunpack.c.l.b16 %v178
    %v218 = vpack.c.b16 %v203, %v202
    %v219 = vpack.c.b16 %v205, %v204
    %v220 = vpack.c.b16 %v207, %v206
    %v221 = vpack.c.b16 %v209, %v208
    %v222 = vpack.c.b16 %v211, %v210
    %v223 = vpack.c.b16 %v213, %v212
    %v224 = vpack.c.b16 %v215, %v214
    %v225 = vpack.c.b16 %v217, %v216
    %234 = vmatprep.subr.bf16.mxu0 0
    %235 = vmatpush1.bf16.msra.mxu0 %v225
    %236 = vmatprep.subr.bf16.mxu0 0
    %237 = vmatpush1.bf16.msra.mxu0 %v224
    %238 = vmatprep.subr.bf16.mxu0 0
    %239 = vmatpush1.bf16.msra.mxu0 %v223
    %240 = vmatprep.subr.bf16.mxu0 0
    %241 = vmatpush1.bf16.msra.mxu0 %v222
    %242 = vmatprep.subr.bf16.mxu0 0
    %243 = vmatpush1.bf16.msra.mxu0 %v221
    %244 = vmatprep.subr.bf16.mxu0 0
    %245 = vmatpush1.bf16.msra.mxu0 %v220
    %246 = vmatprep.subr.bf16.mxu0 0
    %247 = vmatpush1.bf16.msra.mxu0 %v219
    %248 = vmatprep.subr.bf16.mxu0 0
    %249 = vmatpush1.bf16.msra.mxu0 %v218
    %250 = vmatprep.subr.bf16.mxu0 0
    %251 = vmatpush2.bf16.msra.mxu0 0
    %252 = vmatprep.subr.bf16.mxu0 0
    %253 = vmatpush2.bf16.msra.mxu0 0
    %254 = vmatprep.subr.bf16.mxu0 0
    %255 = vmatpush2.bf16.msra.mxu0 0
    %256 = vmatprep.subr.bf16.mxu0 0
    %257 = vmatpush2.bf16.msra.mxu0 0
    %258 = vmatprep.subr.bf16.mxu0 0
    %259 = vmatpush2.bf16.msra.mxu0 0
    %260 = vmatprep.subr.bf16.mxu0 0
    %261 = vmatpush2.bf16.msra.mxu0 0
    %262 = vmatprep.subr.bf16.mxu0 0
    %263 = vmatpush2.bf16.msra.mxu0 0
    %264 = vmatprep.subr.bf16.mxu0 0
    %265 = vmatpush2.bf16.msra.mxu0 0
    %266 = vmatprep.mubr.bf16.mxu0 0
    %267 = vmatmul.mubr.bf16.gmra.mxu0 %v162
    %v268 = vpop.f32.mrf.mxu0
    %v269 = vadd.f32 %v184, %v268
    %v270 = vpop.f32.mrf.mxu0
    %v271 = vpop.f32.mrf.mxu0
    %v272 = vpop.f32.mrf.mxu0
    %273 = vdwg.mxu0
    %v274 = vmax.f32 %v269, 0.0
    %v275 = vpack.c.bf16 %v274, %v274
    %v276 = vld [vmem:[#allocation8] sm:$0xff]
    %v277 = vld [vmem:[#allocation8 + $0x8] sm:$0xff]
    %v278 = vld [vmem:[#allocation8 + $0x10] sm:$0xff]
    %v279 = vld [vmem:[#allocation8 + $0x18] sm:$0xff]
    %v280 = vld [vmem:[#allocation8 + $0x20] sm:$0xff]
    %v281 = vld [vmem:[#allocation8 + $0x28] sm:$0xff]
    %v282 = vld [vmem:[#allocation8 + $0x30] sm:$0xff]
    %v283 = vld [vmem:[#allocation8 + $0x38] sm:$0xff]
    %v284 = vld [vmem:[#allocation8 + $0x40] sm:$0xff]
    %v285 = vld [vmem:[#allocation8 + $0x48] sm:$0xff]
    %v286 = vld [vmem:[#allocation8 + $0x50] sm:$0xff]
    %v287 = vld [vmem:[#allocation8 + $0x58] sm:$0xff]
    %v288 = vld [vmem:[#allocation8 + $0x60] sm:$0xff]
    %v289 = vld [vmem:[#allocation8 + $0x68] sm:$0xff]
    %v290 = vld [vmem:[#allocation8 + $0x70] sm:$0xff]
    %v291 = vld [vmem:[#allocation8 + $0x78] sm:$0xff]
    %v292 = vld [vmem:[%s6] sm:$0x3]
    %v294 = vlaneseq
    %v295 = vshrl.u32 %v294, 7
    %v296 = vsub.s32 0, %v295
    %v297 = vrot.slane %v292, %v296
    %v298 = vlaneseq
    %v299 = vshrl.u32 %v298, 7
    %v300 = vsub.s32 1, %v299
    %v301 = vrot.slane %v292, %v300
    %v320 = vunpack.c.l.b16 %v276
    %v321 = vunpack.c.h.b16 %v276
    %v322 = vunpack.c.l.b16 %v277
    %v323 = vunpack.c.h.b16 %v277
    %v324 = vunpack.c.l.b16 %v278
    %v325 = vunpack.c.h.b16 %v278
    %v326 = vunpack.c.l.b16 %v279
    %v327 = vunpack.c.h.b16 %v279
    %v328 = vunpack.c.l.b16 %v280
    %v329 = vunpack.c.h.b16 %v280
    %v330 = vunpack.c.l.b16 %v281
    %v331 = vunpack.c.h.b16 %v281
    %v332 = vunpack.c.l.b16 %v282
    %v333 = vunpack.c.h.b16 %v282
    %v334 = vunpack.c.l.b16 %v283
    %v335 = vunpack.c.h.b16 %v283
    %v336 = vunpack.c.l.b16 %v284
    %v337 = vunpack.c.h.b16 %v284
    %v338 = vunpack.c.l.b16 %v285
    %v339 = vunpack.c.h.b16 %v285
    %v340 = vunpack.c.l.b16 %v286
    %v341 = vunpack.c.h.b16 %v286
    %v342 = vunpack.c.l.b16 %v287
    %v343 = vunpack.c.h.b16 %v287
    %v344 = vunpack.c.l.b16 %v288
    %v345 = vunpack.c.h.b16 %v288
    %v346 = vunpack.c.l.b16 %v289
    %v347 = vunpack.c.h.b16 %v289
    %v348 = vunpack.c.l.b16 %v290
    %v349 = vunpack.c.h.b16 %v290
    %v350 = vunpack.c.l.b16 %v291
    %v351 = vunpack.c.h.b16 %v291
    %v352 = vpack.c.b16 %v322, %v320
    %v353 = vpack.c.b16 %v323, %v321
    %v354 = vpack.c.b16 %v326, %v324
    %v355 = vpack.c.b16 %v327, %v325
    %v356 = vpack.c.b16 %v330, %v328
    %v357 = vpack.c.b16 %v331, %v329
    %v358 = vpack.c.b16 %v334, %v332
    %v359 = vpack.c.b16 %v335, %v333
    %v360 = vpack.c.b16 %v338, %v336
    %v361 = vpack.c.b16 %v339, %v337
    %v362 = vpack.c.b16 %v342, %v340
    %v363 = vpack.c.b16 %v343, %v341
    %v364 = vpack.c.b16 %v346, %v344
    %v365 = vpack.c.b16 %v347, %v345
    %v366 = vpack.c.b16 %v350, %v348
    %v367 = vpack.c.b16 %v351, %v349
    %384 = vmatprep.subr.bf16.mxu0 %v367
    %385 = vmatpush1.bf16.msra.mxu0 %v366
    %386 = vmatprep.subr.bf16.mxu0 %v365
    %387 = vmatpush1.bf16.msra.mxu0 %v364
    %388 = vmatprep.subr.bf16.mxu0 %v363
    %389 = vmatpush1.bf16.msra.mxu0 %v362
    %390 = vmatprep.subr.bf16.mxu0 %v361
    %391 = vmatpush1.bf16.msra.mxu0 %v360
    %392 = vmatprep.subr.bf16.mxu0 %v359
    %393 = vmatpush1.bf16.msra.mxu0 %v358
    %394 = vmatprep.subr.bf16.mxu0 %v357
    %395 = vmatpush1.bf16.msra.mxu0 %v356
    %396 = vmatprep.subr.bf16.mxu0 %v355
    %397 = vmatpush1.bf16.msra.mxu0 %v354
    %398 = vmatprep.subr.bf16.mxu0 %v353
    %399 = vmatpush1.bf16.msra.mxu0 %v352
    %400 = vmatprep.subr.bf16.mxu0 0
    %401 = vmatpush2.bf16.msra.mxu0 0
    %402 = vmatprep.subr.bf16.mxu0 0
    %403 = vmatpush2.bf16.msra.mxu0 0
    %404 = vmatprep.subr.bf16.mxu0 0
    %405 = vmatpush2.bf16.msra.mxu0 0
    %406 = vmatprep.subr.bf16.mxu0 0
    %407 = vmatpush2.bf16.msra.mxu0 0
    %408 = vmatprep.subr.bf16.mxu0 0
    %409 = vmatpush2.bf16.msra.mxu0 0
    %410 = vmatprep.subr.bf16.mxu0 0
    %411 = vmatpush2.bf16.msra.mxu0 0
    %412 = vmatprep.subr.bf16.mxu0 0
    %413 = vmatpush2.bf16.msra.mxu0 0
    %414 = vmatprep.subr.bf16.mxu0 0
    %415 = vmatpush2.bf16.msra.mxu0 0
    %416 = vmatprep.mubr.bf16.mxu0 0
    %417 = vmatmul.mubr.bf16.gmra.mxu0 %v275
    %v418 = vpop.f32.mrf.mxu0
    %v419 = vadd.f32 %v297, %v418
    %v420 = vpop.f32.mrf.mxu0
    %v421 = vadd.f32 %v301, %v420
    %v422 = vpop.f32.mrf.mxu0
    %v423 = vpop.f32.mrf.mxu0
    %424 = vdwg.mxu0
    %v425 = vmax.f32 %v419, 0.0
    %v426 = vmax.f32 %v421, 0.0
    %v427 = vpack.c.bf16 %v425, %v425
    %v428 = vpack.c.bf16 %v426, %v426
    %v429 = vld [vmem:[#allocation10] sm:$0xf]
    %v430 = vld [vmem:[#allocation10 + $0x4] sm:$0xf]
    %v431 = vld [vmem:[#allocation10 + $0x8] sm:$0xf]
    %v432 = vld [vmem:[#allocation10 + $0xc] sm:$0xf]
    %v433 = vld [vmem:[#allocation10 + $0x10] sm:$0xf]
    %v434 = vld [vmem:[#allocation10 + $0x14] sm:$0xf]
    %v435 = vld [vmem:[#allocation10 + $0x18] sm:$0xf]
    %v436 = vld [vmem:[#allocation10 + $0x1c] sm:$0xf]
    %v437 = vld [vmem:[#allocation10 + $0x20] sm:$0xf]
    %v438 = vld [vmem:[#allocation10 + $0x24] sm:$0xf]
    %v439 = vld [vmem:[#allocation10 + $0x28] sm:$0xf]
    %v440 = vld [vmem:[#allocation10 + $0x2c] sm:$0xf]
    %v441 = vld [vmem:[#allocation10 + $0x30] sm:$0xf]
    %v442 = vld [vmem:[#allocation10 + $0x34] sm:$0xf]
    %v443 = vld [vmem:[#allocation10 + $0x38] sm:$0xf]
    %v444 = vld [vmem:[#allocation10 + $0x3c] sm:$0xf]
    %v445 = vld [vmem:[#allocation10 + $0x40] sm:$0xf]
    %v446 = vld [vmem:[#allocation10 + $0x44] sm:$0xf]
    %v447 = vld [vmem:[#allocation10 + $0x48] sm:$0xf]
    %v448 = vld [vmem:[#allocation10 + $0x4c] sm:$0xf]
    %v449 = vld [vmem:[#allocation10 + $0x50] sm:$0xf]
    %v450 = vld [vmem:[#allocation10 + $0x54] sm:$0xf]
    %v451 = vld [vmem:[#allocation10 + $0x58] sm:$0xf]
    %v452 = vld [vmem:[#allocation10 + $0x5c] sm:$0xf]
    %v453 = vld [vmem:[#allocation10 + $0x60] sm:$0xf]
    %v454 = vld [vmem:[#allocation10 + $0x64] sm:$0xf]
    %v455 = vld [vmem:[#allocation10 + $0x68] sm:$0xf]
    %v456 = vld [vmem:[#allocation10 + $0x6c] sm:$0xf]
    %v457 = vld [vmem:[#allocation10 + $0x70] sm:$0xf]
    %v458 = vld [vmem:[#allocation10 + $0x74] sm:$0xf]
    %v459 = vld [vmem:[#allocation10 + $0x78] sm:$0xf]
    %v460 = vld [vmem:[#allocation10 + $0x7c] sm:$0xf]
    %v461 = vld [vmem:[%s8] sm:$0x1]
    %v463 = vlaneseq
    %v464 = vshrl.u32 %v463, 7
    %v465 = vsub.s32 0, %v464
    %v466 = vrot.slane %v461, %v465
    %v500 = vunpack.c.l.b16 %v429
    %v501 = vunpack.c.l.b16 %v430
    %v502 = vunpack.c.l.b16 %v431
    %v503 = vunpack.c.l.b16 %v432
    %v504 = vunpack.c.l.b16 %v433
    %v505 = vunpack.c.l.b16 %v434
    %v506 = vunpack.c.l.b16 %v435
    %v507 = vunpack.c.l.b16 %v436
    %v508 = vunpack.c.l.b16 %v437
    %v509 = vunpack.c.l.b16 %v438
    %v510 = vunpack.c.l.b16 %v439
    %v511 = vunpack.c.l.b16 %v440
    %v512 = vunpack.c.l.b16 %v441
    %v513 = vunpack.c.l.b16 %v442
    %v514 = vunpack.c.l.b16 %v443
    %v515 = vunpack.c.l.b16 %v444
    %v516 = vunpack.c.l.b16 %v445
    %v517 = vunpack.c.l.b16 %v446
    %v518 = vunpack.c.l.b16 %v447
    %v519 = vunpack.c.l.b16 %v448
    %v520 = vunpack.c.l.b16 %v449
    %v521 = vunpack.c.l.b16 %v450
    %v522 = vunpack.c.l.b16 %v451
    %v523 = vunpack.c.l.b16 %v452
    %v524 = vunpack.c.l.b16 %v453
    %v525 = vunpack.c.l.b16 %v454
    %v526 = vunpack.c.l.b16 %v455
    %v527 = vunpack.c.l.b16 %v456
    %v528 = vunpack.c.l.b16 %v457
    %v529 = vunpack.c.l.b16 %v458
    %v530 = vunpack.c.l.b16 %v459
    %v531 = vunpack.c.l.b16 %v460
    %v532 = vpack.c.b16 %v501, %v500
    %v533 = vpack.c.b16 %v503, %v502
    %v534 = vpack.c.b16 %v505, %v504
    %v535 = vpack.c.b16 %v507, %v506
    %v536 = vpack.c.b16 %v509, %v508
    %v537 = vpack.c.b16 %v511, %v510
    %v538 = vpack.c.b16 %v513, %v512
    %v539 = vpack.c.b16 %v515, %v514
    %v540 = vpack.c.b16 %v517, %v516
    %v541 = vpack.c.b16 %v519, %v518
    %v542 = vpack.c.b16 %v521, %v520
    %v543 = vpack.c.b16 %v523, %v522
    %v544 = vpack.c.b16 %v525, %v524
    %v545 = vpack.c.b16 %v527, %v526
    %v546 = vpack.c.b16 %v529, %v528
    %v547 = vpack.c.b16 %v531, %v530
    %564 = vmatprep.subr.bf16.mxu0 0
    %565 = vmatpush1.bf16.msra.mxu0 %v539
    %566 = vmatprep.subr.bf16.mxu0 0
    %567 = vmatpush1.bf16.msra.mxu0 %v538
    %568 = vmatprep.subr.bf16.mxu0 0
    %569 = vmatpush1.bf16.msra.mxu0 %v537
    %570 = vmatprep.subr.bf16.mxu0 0
    %571 = vmatpush1.bf16.msra.mxu0 %v536
    %572 = vmatprep.subr.bf16.mxu0 0
    %573 = vmatpush1.bf16.msra.mxu0 %v535
    %574 = vmatprep.subr.bf16.mxu0 0
    %575 = vmatpush1.bf16.msra.mxu0 %v534
    %576 = vmatprep.subr.bf16.mxu0 0
    %577 = vmatpush1.bf16.msra.mxu0 %v533
    %578 = vmatprep.subr.bf16.mxu0 0
    %579 = vmatpush1.bf16.msra.mxu0 %v532
    %580 = vmatprep.subr.bf16.mxu0 0
    %581 = vmatpush2.bf16.msra.mxu0 %v547
    %582 = vmatprep.subr.bf16.mxu0 0
    %583 = vmatpush2.bf16.msra.mxu0 %v546
    %584 = vmatprep.subr.bf16.mxu0 0
    %585 = vmatpush2.bf16.msra.mxu0 %v545
    %586 = vmatprep.subr.bf16.mxu0 0
    %587 = vmatpush2.bf16.msra.mxu0 %v544
    %588 = vmatprep.subr.bf16.mxu0 0
    %589 = vmatpush2.bf16.msra.mxu0 %v543
    %590 = vmatprep.subr.bf16.mxu0 0
    %591 = vmatpush2.bf16.msra.mxu0 %v542
    %592 = vmatprep.subr.bf16.mxu0 0
    %593 = vmatpush2.bf16.msra.mxu0 %v541
    %594 = vmatprep.subr.bf16.mxu0 0
    %595 = vmatpush2.bf16.msra.mxu0 %v540
    %596 = vmatprep.mubr.bf16.mxu0 %v428
    %597 = vmatmul.mubr.bf16.gmra.mxu0 %v427
    %v598 = vpop.f32.mrf.mxu0
    %v599 = vadd.f32 %v466, %v598
    %v600 = vpop.f32.mrf.mxu0
    %v601 = vpop.f32.mrf.mxu0
    %v602 = vpop.f32.mrf.mxu0
    %603 = vdwg.mxu0
    %604 = vst [vmem:[#allocation11] sm:$0xff] %v599
    // Predicated region
    $region58: #{tpu_custom_call.1} parent=1 // pred_check
      _
    $region59: #{tpu_custom_call.1} parent=1 // pred_check_branch
      %606 = sbr.rel (0) target = $region61
    $region60: #{tpu_custom_call.1} parent=1 // pred_region
      %s608 = ssub.s32 128, 128
      %609 = vsyncadd [#allocation4], %s608
      %s611 = sshll.u32 [#allocation11], 4
      %s612 = int_to_ptr.vmem [resolvable:$true] %s611
      %614 = dma.vmem_to_hbm [thread:$0]  %s612, 128, %s9, [#allocation4]
    $region61: #{tpu_custom_call.1} parent=1 // pred_fallthru
      _
    // Predicated region
    $region62: #{tpu_custom_call.1} parent=1 // pred_check
      _
    $region63: #{tpu_custom_call.1} parent=1 // pred_check_branch
      %616 = sbr.rel (0) target = $region65
    $region64: #{tpu_custom_call.1} parent=1 // pred_region
      %617 = dma.done [#allocation4], 128
    $region65: #{tpu_custom_call.1} parent=1 // pred_fallthru
      _
    %618 = vsyncpa [#allocation3], 1
    %619 = vsyncpa [#allocation6], 1
    %620 = vsyncpa [#allocation9], 1
    %621 = vsyncpa [#allocation4], 1

</llo_original>
